<compile_context>
chip_gen: v7x
topology: tpu7x:2x2x1
jax: 0.10.0
libtpu: 0.0.40
codegen_flags: <defaults>
</compile_context>

<pallas_src>
import jax
import jax.numpy as jnp
from jax import lax
from jax.experimental import pallas as pl
from jax.experimental.pallas import tpu as pltpu

LRELU_SLOPE = 0.2


def _shift_flat(v, s, hw):
    """out[:, p] = v[:, p + s] (zero-filled past the ends of the flat array). v: (C, hw)."""
    if s == 0:
        return v
    c = v.shape[0]
    if s > 0:
        pad = jnp.zeros((c, s), v.dtype)
        return jnp.concatenate([v[:, s:], pad], axis=1)
    pad = jnp.zeros((c, -s), v.dtype)
    return jnp.concatenate([pad, v[:, :hw + s]], axis=1)


def _make_kernel(H, W, Cin, Cout):
    HW = H * W
    Ho, Wo = H // 2, W // 2

    def kernel(x_ref, w1_ref, b1_ref, w2_ref, b2_ref, p_ref, out_ref):
        # Column-validity masks.  Row (h) out-of-range taps are exactly covered by the
        # zero padding _shift_flat inserts at the flat-array ends, so only the two
        # column masks are ever needed (taps with dw == 0 need no mask at all).
        w_pos = lax.broadcasted_iota(jnp.int32, (1, HW), 1) % W
        col_mask = {-1: w_pos >= 1, 0: None, 1: w_pos <= W - 2}

        def conv3x3_lrelu(v_bf16, w_ref, b_ref):
            # v_bf16: (C_in, HW) bf16 ; w_ref: (C_out, 9*C_in) bf16 ; b_ref: (C_out, 1) f32
            taps = []
            for dh in (-1, 0, 1):
                for dw in (-1, 0, 1):
                    t = _shift_flat(v_bf16, dh * W + dw, HW)
                    m = col_mask[dw]
                    if m is not None:
                        t = jnp.where(m, t, jnp.zeros_like(t))
                    taps.append(t)
            patches = jnp.concatenate(taps, axis=0)               # (9*C_in, HW) bf16
            acc = jnp.dot(w_ref[...], patches,
                          preferred_element_type=jnp.float32)     # (C_out, HW) f32
            acc = acc + b_ref[...]                                # (C_out, 1) lane-broadcast
            return jnp.where(acc > 0, acc, LRELU_SLOPE * acc)     # LeakyReLU(0.2), f32

        x = x_ref[...]                                            # (Cin, HW) bf16
        y1 = conv3x3_lrelu(x, w1_ref, b1_ref)                     # (Cin, HW) f32
        y2 = conv3x3_lrelu(y1.astype(jnp.bfloat16), w2_ref, b2_ref)  # (Cout, HW) f32

        # AvgPool2d(2) as one MXU matmul against the 0.25-valued pooling matrix:
        # (Cout, HW) @ (HW, Ho*Wo) -> one lane-dense (Cout, Ho*Wo) store, f32 exact.
        pooled = jnp.dot(y2, p_ref[...], preferred_element_type=jnp.float32)
        out_ref[...] = pooled.astype(out_ref.dtype)

    return kernel


def _make_pool_matrix(H, W):
    """(H*W, Ho*Wo) f32 matrix with 0.25 where flat position p maps to pooled cell q."""
    Ho, Wo = H // 2, W // 2
    pos = jnp.arange(H * W)
    ph, pw = pos // W, pos % W
    q_of_p = (ph // 2) * Wo + (pw // 2)
    return (q_of_p[:, None] == jnp.arange(Ho * Wo)[None, :]).astype(jnp.float32) * 0.25


def dis_general_conv_block(x_nchw, w1, b1, w2, b2):
    """x_nchw: (N,Cin,H,W). w1: (Cin,Cin,3,3) OIHW, w2: (Cout,Cin,3,3) OIHW."""
    N, Cin, H, W = x_nchw.shape
    Cout = w2.shape[0]
    Ho, Wo = H // 2, W // 2
    HW = H * W

    # channels-first + flattened spatial: a free reshape of NCHW; bf16 operands halve
    # DMA bytes and double MXU throughput.
    x_flat = x_nchw.reshape(N, Cin, HW).astype(jnp.bfloat16)

    # (O, I, 3, 3) -> (O, 9*I) with column index = (dh*3 + dw)*I + i  (im2col weight matrix)
    w1_mat = jnp.transpose(w1, (0, 2, 3, 1)).reshape(Cin, 9 * Cin).astype(jnp.bfloat16)
    w2_mat = jnp.transpose(w2, (0, 2, 3, 1)).reshape(Cout, 9 * Cin).astype(jnp.bfloat16)
    b1_col = b1.reshape(Cin, 1).astype(jnp.float32)
    b2_col = b2.reshape(Cout, 1).astype(jnp.float32)
    pool_mat = _make_pool_matrix(H, W)                            # (HW, Ho*Wo) f32

    kernel = _make_kernel(H, W, Cin, Cout)

    out_flat = pl.pallas_call(
        kernel,
        out_shape=jax.ShapeDtypeStruct((N, Cout, Ho * Wo), jnp.float32),
        grid_spec=pltpu.PrefetchScalarGridSpec(
            num_scalar_prefetch=0,
            grid=(N,),
            in_specs=[
                pl.BlockSpec((None, Cin, HW), lambda b: (b, 0, 0)),
                pl.BlockSpec((Cin, 9 * Cin), lambda b: (0, 0)),
                pl.BlockSpec((Cin, 1), lambda b: (0, 0)),
                pl.BlockSpec((Cout, 9 * Cin), lambda b: (0, 0)),
                pl.BlockSpec((Cout, 1), lambda b: (0, 0)),
                pl.BlockSpec((HW, Ho * Wo), lambda b: (0, 0)),
            ],
            out_specs=pl.BlockSpec((None, Cout, Ho * Wo), lambda b: (b, 0, 0)),
        ),
        compiler_params=pltpu.CompilerParams(dimension_semantics=("parallel",)),
    )(x_flat, w1_mat, b1_col, w2_mat, b2_col, pool_mat)

    return out_flat.reshape(N, Cout, Ho, Wo)                     # NCHW


def ref_forward(x, w1, b1, w2, b2):
    """Pure-JAX f32 reference mirroring the PyTorch module (NCHW)."""
    def conv(v, w, b):
        y = lax.conv_general_dilated(
            v, w, window_strides=(1, 1), padding=((1, 1), (1, 1)),
            dimension_numbers=('NCHW', 'OIHW', 'NCHW'))
        return y + b[None, :, None, None]
    lrelu = lambda t: jnp.where(t > 0, t, LRELU_SLOPE * t)
    y = lrelu(conv(x, w1, b1))
    y = lrelu(conv(y, w2, b2))
    n, c, hh, ww = y.shape
    return y.reshape(n, c, hh // 2, 2, ww // 2, 2).mean(axis=(3, 5))


if __name__ == "__main__":
    N, Cin, Cout, H, W = 2, 4, 8, 16, 16

    key = jax.random.PRNGKey(0)
    kx, kw1, kb1, kw2, kb2 = jax.random.split(key, 5)

    x = jax.random.normal(kx, (N, Cin, H, W), dtype=jnp.float32)
    w1 = 0.1 * jax.random.normal(kw1, (Cin, Cin, 3, 3), dtype=jnp.float32)
    b1 = 0.1 * jax.random.normal(kb1, (Cin,), dtype=jnp.float32)
    w2 = 0.1 * jax.random.normal(kw2, (Cout, Cin, 3, 3), dtype=jnp.float32)
    b2 = 0.1 * jax.random.normal(kb2, (Cout,), dtype=jnp.float32)

    # Round operands through bf16 once so kernel and reference see identical operand
    # values; remaining differences are f32-accumulation order + the bf16 cast of the
    # intermediate activation inside the kernel.
    x = x.astype(jnp.bfloat16).astype(jnp.float32)
    w1 = w1.astype(jnp.bfloat16).astype(jnp.float32)
    w2 = w2.astype(jnp.bfloat16).astype(jnp.float32)

    out = jax.block_until_ready(dis_general_conv_block(x, w1, b1, w2, b2))
    ref = jax.block_until_ready(ref_forward(x, w1, b1, w2, b2))

    assert out.shape == (N, Cout, H // 2, W // 2), out.shape
    max_err = float(jnp.max(jnp.abs(out - ref)))
    assert jnp.allclose(out, ref, atol=2e-2, rtol=2e-2), max_err

    print("KERNEL_OK")
</pallas_src>

<mosaic_0001>
module attributes {stable_mosaic.version = 11 : i64} {
  func.func @kernel(%arg0: i32, %arg1: memref<1x4x256xbf16, #tpu.memory_space<vmem>>, %arg2: memref<4x36xbf16, #tpu.memory_space<vmem>>, %arg3: memref<4x1xf32, #tpu.memory_space<vmem>>, %arg4: memref<8x36xbf16, #tpu.memory_space<vmem>>, %arg5: memref<8x1xf32, #tpu.memory_space<vmem>>, %arg6: memref<256x64xf32, #tpu.memory_space<vmem>>, %arg7: memref<1x8x64xf32, #tpu.memory_space<vmem>>) attributes {dimension_semantics = [#tpu.dimension_semantics<parallel>], iteration_bounds = array<i64: 2>, scalar_prefetch = 0 : i64, scratch_operands = 0 : i64, tpu.core_type = #tpu.core_type<tc>, window_params = [{transform_indices = @transform_0, window_bounds = array<i64: 1, 4, 256>}, {pipeline_mode = #tpu.pipeline_mode<synchronous>, transform_indices = @transform_1, window_bounds = array<i64: 4, 36>}, {pipeline_mode = #tpu.pipeline_mode<synchronous>, transform_indices = @transform_2, window_bounds = array<i64: 4, 1>}, {pipeline_mode = #tpu.pipeline_mode<synchronous>, transform_indices = @transform_3, window_bounds = array<i64: 8, 36>}, {pipeline_mode = #tpu.pipeline_mode<synchronous>, transform_indices = @transform_4, window_bounds = array<i64: 8, 1>}, {pipeline_mode = #tpu.pipeline_mode<synchronous>, transform_indices = @transform_5, window_bounds = array<i64: 256, 64>}, {transform_indices = @transform_6, window_bounds = array<i64: 1, 8, 64>}]} {
    %0 = tpu.iota {dimensions = array<i32: 1>} : vector<1x256xi32>
    %c16_i32 = arith.constant 16 : i32
    %c0_i32 = arith.constant 0 : i32
    %1 = arith.cmpi eq, %c16_i32, %c0_i32 : i32
    %c1_i32 = arith.constant 1 : i32
    %2 = arith.select %1, %c1_i32, %c16_i32 : i32
    %3 = vector.broadcast %2 : i32 to vector<1x256xi32>
    %4 = arith.remsi %0, %3 : vector<1x256xi32>
    %c0_i32_0 = arith.constant 0 : i32
    %5 = vector.broadcast %c0_i32_0 : i32 to vector<1x256xi32>
    %6 = arith.cmpi ne, %4, %5 : vector<1x256xi32>
    %c0_i32_1 = arith.constant 0 : i32
    %7 = vector.broadcast %c0_i32_1 : i32 to vector<1x256xi32>
    %8 = arith.cmpi slt, %4, %7 : vector<1x256xi32>
    %c0_i32_2 = arith.constant 0 : i32
    %9 = arith.cmpi slt, %2, %c0_i32_2 : i32
    %10 = vector.broadcast %9 : i1 to vector<1x256xi1>
    %11 = vector.broadcast %10 : vector<1x256xi1> to vector<1x256xi1>
    %12 = arith.xori %8, %11 : vector<1x256xi1>
    %13 = arith.andi %12, %6 : vector<1x256xi1>
    %14 = vector.broadcast %2 : i32 to vector<1x256xi32>
    %15 = arith.addi %4, %14 : vector<1x256xi32>
    %16 = arith.select %13, %15, %4 : vector<1x256xi1>, vector<1x256xi32>
    %c1_i32_3 = arith.constant 1 : i32
    %17 = vector.broadcast %c1_i32_3 : i32 to vector<1x256xi32>
    %18 = arith.cmpi sge, %16, %17 : vector<1x256xi32>
    %c14_i32 = arith.constant 14 : i32
    %19 = vector.broadcast %c14_i32 : i32 to vector<1x256xi32>
    %20 = arith.cmpi sle, %16, %19 : vector<1x256xi32>
    %c0 = arith.constant 0 : index
    %c0_4 = arith.constant 0 : index
    %c0_5 = arith.constant 0 : index
    %21 = vector.load %arg1[%c0, %c0_4, %c0_5] : memref<1x4x256xbf16, #tpu.memory_space<vmem>>, vector<1x4x256xbf16>
    %22 = vector.shape_cast %21 : vector<1x4x256xbf16> to vector<4x256xbf16>
    %cst = arith.constant 0.000000e+00 : bf16
    %23 = vector.broadcast %cst : bf16 to vector<4x17xbf16>
    %24 = vector.extract_strided_slice %22 {offsets = [0, 0], sizes = [4, 239], strides = [1, 1]} : vector<4x256xbf16> to vector<4x239xbf16>
    %25 = tpu.concatenate %23, %24 in 1 : vector<4x17xbf16>, vector<4x239xbf16> -> vector<4x256xbf16>
    %cst_6 = arith.constant 0.000000e+00 : bf16
    %26 = vector.broadcast %cst_6 : bf16 to vector<4x256xbf16>
    %27 = vector.shape_cast %18 : vector<1x256xi1> to vector<1x256xi1>
    %28 = vector.broadcast %27 : vector<1x256xi1> to vector<4x256xi1>
    %29 = arith.select %28, %25, %26 : vector<4x256xi1>, vector<4x256xbf16>
    %cst_7 = arith.constant 0.000000e+00 : bf16
    %30 = vector.broadcast %cst_7 : bf16 to vector<4x16xbf16>
    %31 = vector.extract_strided_slice %22 {offsets = [0, 0], sizes = [4, 240], strides = [1, 1]} : vector<4x256xbf16> to vector<4x240xbf16>
    %32 = tpu.concatenate %30, %31 in 1 : vector<4x16xbf16>, vector<4x240xbf16> -> vector<4x256xbf16>
    %cst_8 = arith.constant 0.000000e+00 : bf16
    %33 = vector.broadcast %cst_8 : bf16 to vector<4x15xbf16>
    %34 = vector.extract_strided_slice %22 {offsets = [0, 0], sizes = [4, 241], strides = [1, 1]} : vector<4x256xbf16> to vector<4x241xbf16>
    %35 = tpu.concatenate %33, %34 in 1 : vector<4x15xbf16>, vector<4x241xbf16> -> vector<4x256xbf16>
    %cst_9 = arith.constant 0.000000e+00 : bf16
    %36 = vector.broadcast %cst_9 : bf16 to vector<4x256xbf16>
    %37 = vector.shape_cast %20 : vector<1x256xi1> to vector<1x256xi1>
    %38 = vector.broadcast %37 : vector<1x256xi1> to vector<4x256xi1>
    %39 = arith.select %38, %35, %36 : vector<4x256xi1>, vector<4x256xbf16>
    %cst_10 = arith.constant 0.000000e+00 : bf16
    %40 = vector.broadcast %cst_10 : bf16 to vector<4x1xbf16>
    %41 = vector.extract_strided_slice %22 {offsets = [0, 0], sizes = [4, 255], strides = [1, 1]} : vector<4x256xbf16> to vector<4x255xbf16>
    %42 = tpu.concatenate %40, %41 in 1 : vector<4x1xbf16>, vector<4x255xbf16> -> vector<4x256xbf16>
    %cst_11 = arith.constant 0.000000e+00 : bf16
    %43 = vector.broadcast %cst_11 : bf16 to vector<4x256xbf16>
    %44 = vector.shape_cast %18 : vector<1x256xi1> to vector<1x256xi1>
    %45 = vector.broadcast %44 : vector<1x256xi1> to vector<4x256xi1>
    %46 = arith.select %45, %42, %43 : vector<4x256xi1>, vector<4x256xbf16>
    %cst_12 = arith.constant 0.000000e+00 : bf16
    %47 = vector.broadcast %cst_12 : bf16 to vector<4x1xbf16>
    %48 = vector.extract_strided_slice %22 {offsets = [0, 1], sizes = [4, 255], strides = [1, 1]} : vector<4x256xbf16> to vector<4x255xbf16>
    %49 = tpu.concatenate %48, %47 in 1 : vector<4x255xbf16>, vector<4x1xbf16> -> vector<4x256xbf16>
    %cst_13 = arith.constant 0.000000e+00 : bf16
    %50 = vector.broadcast %cst_13 : bf16 to vector<4x256xbf16>
    %51 = vector.shape_cast %20 : vector<1x256xi1> to vector<1x256xi1>
    %52 = vector.broadcast %51 : vector<1x256xi1> to vector<4x256xi1>
    %53 = arith.select %52, %49, %50 : vector<4x256xi1>, vector<4x256xbf16>
    %cst_14 = arith.constant 0.000000e+00 : bf16
    %54 = vector.broadcast %cst_14 : bf16 to vector<4x15xbf16>
    %55 = vector.extract_strided_slice %22 {offsets = [0, 15], sizes = [4, 241], strides = [1, 1]} : vector<4x256xbf16> to vector<4x241xbf16>
    %56 = tpu.concatenate %55, %54 in 1 : vector<4x241xbf16>, vector<4x15xbf16> -> vector<4x256xbf16>
    %cst_15 = arith.constant 0.000000e+00 : bf16
    %57 = vector.broadcast %cst_15 : bf16 to vector<4x256xbf16>
    %58 = vector.shape_cast %18 : vector<1x256xi1> to vector<1x256xi1>
    %59 = vector.broadcast %58 : vector<1x256xi1> to vector<4x256xi1>
    %60 = arith.select %59, %56, %57 : vector<4x256xi1>, vector<4x256xbf16>
    %cst_16 = arith.constant 0.000000e+00 : bf16
    %61 = vector.broadcast %cst_16 : bf16 to vector<4x16xbf16>
    %62 = vector.extract_strided_slice %22 {offsets = [0, 16], sizes = [4, 240], strides = [1, 1]} : vector<4x256xbf16> to vector<4x240xbf16>
    %63 = tpu.concatenate %62, %61 in 1 : vector<4x240xbf16>, vector<4x16xbf16> -> vector<4x256xbf16>
    %cst_17 = arith.constant 0.000000e+00 : bf16
    %64 = vector.broadcast %cst_17 : bf16 to vector<4x17xbf16>
    %65 = vector.extract_strided_slice %22 {offsets = [0, 17], sizes = [4, 239], strides = [1, 1]} : vector<4x256xbf16> to vector<4x239xbf16>
    %66 = tpu.concatenate %65, %64 in 1 : vector<4x239xbf16>, vector<4x17xbf16> -> vector<4x256xbf16>
    %cst_18 = arith.constant 0.000000e+00 : bf16
    %67 = vector.broadcast %cst_18 : bf16 to vector<4x256xbf16>
    %68 = vector.shape_cast %20 : vector<1x256xi1> to vector<1x256xi1>
    %69 = vector.broadcast %68 : vector<1x256xi1> to vector<4x256xi1>
    %70 = arith.select %69, %66, %67 : vector<4x256xi1>, vector<4x256xbf16>
    %71 = tpu.concatenate %29, %32, %39, %46, %22, %53, %60, %63, %70 in 0 : vector<4x256xbf16>, vector<4x256xbf16>, vector<4x256xbf16>, vector<4x256xbf16>, vector<4x256xbf16>, vector<4x256xbf16>, vector<4x256xbf16>, vector<4x256xbf16>, vector<4x256xbf16> -> vector<36x256xbf16>
    %c0_19 = arith.constant 0 : index
    %c0_20 = arith.constant 0 : index
    %72 = vector.load %arg2[%c0_19, %c0_20] : memref<4x36xbf16, #tpu.memory_space<vmem>>, vector<4x36xbf16>
    %cst_21 = arith.constant dense<0.000000e+00> : vector<4x256xf32>
    %73 = tpu.matmul %72, %71, %cst_21 {dimension_numbers = #tpu.dot_dimension_numbers<[1], [0], [0], [1], [0, 0, 1, 1], [], []>} : vector<4x36xbf16>, vector<36x256xbf16>, vector<4x256xf32> -> vector<4x256xf32>
    %c0_22 = arith.constant 0 : index
    %c0_23 = arith.constant 0 : index
    %74 = vector.load %arg3[%c0_22, %c0_23] : memref<4x1xf32, #tpu.memory_space<vmem>>, vector<4x1xf32>
    %75 = vector.broadcast %74 : vector<4x1xf32> to vector<4x256xf32>
    %76 = arith.addf %73, %75 : vector<4x256xf32>
    %cst_24 = arith.constant 0.000000e+00 : f32
    %77 = vector.broadcast %cst_24 : f32 to vector<4x256xf32>
    %78 = arith.cmpf ogt, %76, %77 : vector<4x256xf32>
    %cst_25 = arith.constant 2.000000e-01 : f32
    %79 = vector.broadcast %cst_25 : f32 to vector<4x256xf32>
    %80 = arith.mulf %79, %76 : vector<4x256xf32>
    %81 = arith.select %78, %76, %80 : vector<4x256xi1>, vector<4x256xf32>
    %82 = arith.truncf %81 : vector<4x256xf32> to vector<4x256xbf16>
    %cst_26 = arith.constant 0.000000e+00 : bf16
    %83 = vector.broadcast %cst_26 : bf16 to vector<4x17xbf16>
    %84 = vector.extract_strided_slice %82 {offsets = [0, 0], sizes = [4, 239], strides = [1, 1]} : vector<4x256xbf16> to vector<4x239xbf16>
    %85 = tpu.concatenate %83, %84 in 1 : vector<4x17xbf16>, vector<4x239xbf16> -> vector<4x256xbf16>
    %cst_27 = arith.constant 0.000000e+00 : bf16
    %86 = vector.broadcast %cst_27 : bf16 to vector<4x256xbf16>
    %87 = vector.shape_cast %18 : vector<1x256xi1> to vector<1x256xi1>
    %88 = vector.broadcast %87 : vector<1x256xi1> to vector<4x256xi1>
    %89 = arith.select %88, %85, %86 : vector<4x256xi1>, vector<4x256xbf16>
    %cst_28 = arith.constant 0.000000e+00 : bf16
    %90 = vector.broadcast %cst_28 : bf16 to vector<4x16xbf16>
    %91 = vector.extract_strided_slice %82 {offsets = [0, 0], sizes = [4, 240], strides = [1, 1]} : vector<4x256xbf16> to vector<4x240xbf16>
    %92 = tpu.concatenate %90, %91 in 1 : vector<4x16xbf16>, vector<4x240xbf16> -> vector<4x256xbf16>
    %cst_29 = arith.constant 0.000000e+00 : bf16
    %93 = vector.broadcast %cst_29 : bf16 to vector<4x15xbf16>
    %94 = vector.extract_strided_slice %82 {offsets = [0, 0], sizes = [4, 241], strides = [1, 1]} : vector<4x256xbf16> to vector<4x241xbf16>
    %95 = tpu.concatenate %93, %94 in 1 : vector<4x15xbf16>, vector<4x241xbf16> -> vector<4x256xbf16>
    %cst_30 = arith.constant 0.000000e+00 : bf16
    %96 = vector.broadcast %cst_30 : bf16 to vector<4x256xbf16>
    %97 = vector.shape_cast %20 : vector<1x256xi1> to vector<1x256xi1>
    %98 = vector.broadcast %97 : vector<1x256xi1> to vector<4x256xi1>
    %99 = arith.select %98, %95, %96 : vector<4x256xi1>, vector<4x256xbf16>
    %cst_31 = arith.constant 0.000000e+00 : bf16
    %100 = vector.broadcast %cst_31 : bf16 to vector<4x1xbf16>
    %101 = vector.extract_strided_slice %82 {offsets = [0, 0], sizes = [4, 255], strides = [1, 1]} : vector<4x256xbf16> to vector<4x255xbf16>
    %102 = tpu.concatenate %100, %101 in 1 : vector<4x1xbf16>, vector<4x255xbf16> -> vector<4x256xbf16>
    %cst_32 = arith.constant 0.000000e+00 : bf16
    %103 = vector.broadcast %cst_32 : bf16 to vector<4x256xbf16>
    %104 = vector.shape_cast %18 : vector<1x256xi1> to vector<1x256xi1>
    %105 = vector.broadcast %104 : vector<1x256xi1> to vector<4x256xi1>
    %106 = arith.select %105, %102, %103 : vector<4x256xi1>, vector<4x256xbf16>
    %cst_33 = arith.constant 0.000000e+00 : bf16
    %107 = vector.broadcast %cst_33 : bf16 to vector<4x1xbf16>
    %108 = vector.extract_strided_slice %82 {offsets = [0, 1], sizes = [4, 255], strides = [1, 1]} : vector<4x256xbf16> to vector<4x255xbf16>
    %109 = tpu.concatenate %108, %107 in 1 : vector<4x255xbf16>, vector<4x1xbf16> -> vector<4x256xbf16>
    %cst_34 = arith.constant 0.000000e+00 : bf16
    %110 = vector.broadcast %cst_34 : bf16 to vector<4x256xbf16>
    %111 = vector.shape_cast %20 : vector<1x256xi1> to vector<1x256xi1>
    %112 = vector.broadcast %111 : vector<1x256xi1> to vector<4x256xi1>
    %113 = arith.select %112, %109, %110 : vector<4x256xi1>, vector<4x256xbf16>
    %cst_35 = arith.constant 0.000000e+00 : bf16
    %114 = vector.broadcast %cst_35 : bf16 to vector<4x15xbf16>
    %115 = vector.extract_strided_slice %82 {offsets = [0, 15], sizes = [4, 241], strides = [1, 1]} : vector<4x256xbf16> to vector<4x241xbf16>
    %116 = tpu.concatenate %115, %114 in 1 : vector<4x241xbf16>, vector<4x15xbf16> -> vector<4x256xbf16>
    %cst_36 = arith.constant 0.000000e+00 : bf16
    %117 = vector.broadcast %cst_36 : bf16 to vector<4x256xbf16>
    %118 = vector.shape_cast %18 : vector<1x256xi1> to vector<1x256xi1>
    %119 = vector.broadcast %118 : vector<1x256xi1> to vector<4x256xi1>
    %120 = arith.select %119, %116, %117 : vector<4x256xi1>, vector<4x256xbf16>
    %cst_37 = arith.constant 0.000000e+00 : bf16
    %121 = vector.broadcast %cst_37 : bf16 to vector<4x16xbf16>
    %122 = vector.extract_strided_slice %82 {offsets = [0, 16], sizes = [4, 240], strides = [1, 1]} : vector<4x256xbf16> to vector<4x240xbf16>
    %123 = tpu.concatenate %122, %121 in 1 : vector<4x240xbf16>, vector<4x16xbf16> -> vector<4x256xbf16>
    %cst_38 = arith.constant 0.000000e+00 : bf16
    %124 = vector.broadcast %cst_38 : bf16 to vector<4x17xbf16>
    %125 = vector.extract_strided_slice %82 {offsets = [0, 17], sizes = [4, 239], strides = [1, 1]} : vector<4x256xbf16> to vector<4x239xbf16>
    %126 = tpu.concatenate %125, %124 in 1 : vector<4x239xbf16>, vector<4x17xbf16> -> vector<4x256xbf16>
    %cst_39 = arith.constant 0.000000e+00 : bf16
    %127 = vector.broadcast %cst_39 : bf16 to vector<4x256xbf16>
    %128 = vector.shape_cast %20 : vector<1x256xi1> to vector<1x256xi1>
    %129 = vector.broadcast %128 : vector<1x256xi1> to vector<4x256xi1>
    %130 = arith.select %129, %126, %127 : vector<4x256xi1>, vector<4x256xbf16>
    %131 = tpu.concatenate %89, %92, %99, %106, %82, %113, %120, %123, %130 in 0 : vector<4x256xbf16>, vector<4x256xbf16>, vector<4x256xbf16>, vector<4x256xbf16>, vector<4x256xbf16>, vector<4x256xbf16>, vector<4x256xbf16>, vector<4x256xbf16>, vector<4x256xbf16> -> vector<36x256xbf16>
    %c0_40 = arith.constant 0 : index
    %c0_41 = arith.constant 0 : index
    %132 = vector.load %arg4[%c0_40, %c0_41] : memref<8x36xbf16, #tpu.memory_space<vmem>>, vector<8x36xbf16>
    %cst_42 = arith.constant dense<0.000000e+00> : vector<8x256xf32>
    %133 = tpu.matmul %132, %131, %cst_42 {dimension_numbers = #tpu.dot_dimension_numbers<[1], [0], [0], [1], [0, 0, 1, 1], [], []>} : vector<8x36xbf16>, vector<36x256xbf16>, vector<8x256xf32> -> vector<8x256xf32>
    %c0_43 = arith.constant 0 : index
    %c0_44 = arith.constant 0 : index
    %134 = vector.load %arg5[%c0_43, %c0_44] : memref<8x1xf32, #tpu.memory_space<vmem>>, vector<8x1xf32>
    %135 = vector.broadcast %134 : vector<8x1xf32> to vector<8x256xf32>
    %136 = arith.addf %133, %135 : vector<8x256xf32>
    %cst_45 = arith.constant 0.000000e+00 : f32
    %137 = vector.broadcast %cst_45 : f32 to vector<8x256xf32>
    %138 = arith.cmpf ogt, %136, %137 : vector<8x256xf32>
    %cst_46 = arith.constant 2.000000e-01 : f32
    %139 = vector.broadcast %cst_46 : f32 to vector<8x256xf32>
    %140 = arith.mulf %139, %136 : vector<8x256xf32>
    %141 = arith.select %138, %136, %140 : vector<8x256xi1>, vector<8x256xf32>
    %c0_47 = arith.constant 0 : index
    %c0_48 = arith.constant 0 : index
    %142 = vector.load %arg6[%c0_47, %c0_48] : memref<256x64xf32, #tpu.memory_space<vmem>>, vector<256x64xf32>
    %cst_49 = arith.constant dense<0.000000e+00> : vector<8x64xf32>
    %143 = tpu.matmul %141, %142, %cst_49 {dimension_numbers = #tpu.dot_dimension_numbers<[1], [0], [0], [1], [0, 0, 1, 1], [], []>} : vector<8x256xf32>, vector<256x64xf32>, vector<8x64xf32> -> vector<8x64xf32>
    %c0_50 = arith.constant 0 : index
    %c0_51 = arith.constant 0 : index
    %c0_52 = arith.constant 0 : index
    %144 = vector.load %arg7[%c0_50, %c0_51, %c0_52] : memref<1x8x64xf32, #tpu.memory_space<vmem>>, vector<1x8x64xf32>
    %145 = vector.shape_cast %144 : vector<1x8x64xf32> to vector<8x64xf32>
    %146 = vector.shape_cast %143 : vector<8x64xf32> to vector<1x8x64xf32>
    tpu.vector_store %arg7[%c0_50, %c0_51, %c0_52], %146 {strides = array<i32>} : memref<1x8x64xf32, #tpu.memory_space<vmem>>, vector<1x8x64xf32>,
    return
  }
  func.func @transform_0(%arg0: i32) -> (i32, i32, i32) {
    %c0_i32 = arith.constant 0 : i32
    %c0_i32_0 = arith.constant 0 : i32
    %c0_i32_1 = arith.constant 0 : i32
    return %arg0, %c0_i32, %c0_i32_0 : i32, i32, i32
  }
  func.func @transform_1(%arg0: i32) -> (i32, i32) {
    %c0_i32 = arith.constant 0 : i32
    %c0_i32_0 = arith.constant 0 : i32
    %c0_i32_1 = arith.constant 0 : i32
    return %c0_i32, %c0_i32_0 : i32, i32
  }
  func.func @transform_2(%arg0: i32) -> (i32, i32) {
    %c0_i32 = arith.constant 0 : i32
    %c0_i32_0 = arith.constant 0 : i32
    %c0_i32_1 = arith.constant 0 : i32
    return %c0_i32, %c0_i32_0 : i32, i32
  }
  func.func @transform_3(%arg0: i32) -> (i32, i32) {
    %c0_i32 = arith.constant 0 : i32
    %c0_i32_0 = arith.constant 0 : i32
    %c0_i32_1 = arith.constant 0 : i32
    return %c0_i32, %c0_i32_0 : i32, i32
  }
  func.func @transform_4(%arg0: i32) -> (i32, i32) {
    %c0_i32 = arith.constant 0 : i32
    %c0_i32_0 = arith.constant 0 : i32
    %c0_i32_1 = arith.constant 0 : i32
    return %c0_i32, %c0_i32_0 : i32, i32
  }
  func.func @transform_5(%arg0: i32) -> (i32, i32) {
    %c0_i32 = arith.constant 0 : i32
    %c0_i32_0 = arith.constant 0 : i32
    %c0_i32_1 = arith.constant 0 : i32
    return %c0_i32, %c0_i32_0 : i32, i32
  }
  func.func @transform_6(%arg0: i32) -> (i32, i32, i32) {
    %c0_i32 = arith.constant 0 : i32
    %c0_i32_0 = arith.constant 0 : i32
    %c0_i32_1 = arith.constant 0 : i32
    return %arg0, %c0_i32, %c0_i32_0 : i32, i32, i32
  }
}

</mosaic_0001>

<llo_original>
// kernel: tpu_custom_call.1
$region0: #{tpu_custom_call.1}
  #allocation0 [shape = 'u32[]', space=smem, size = 0x4, offset = 0x4, fixed_abs, tag = 'smem constant byte address 0x4 - core index']
  #allocation1 [shape = 'u32[144,128]{1,0:T(1,128)}', space=vmem, size = 0x12000, scoped, tag = 'internal scratch']
  %s0 = inlined_call_operand.vmem [shape: bf16[2,4,256], index: 0, kind: input, shape index: {}]
  %s1 = inlined_call_operand.vmem [shape: bf16[4,36], index: 1, kind: input, shape index: {}]
  %s2 = inlined_call_operand.vmem [shape: f32[4,1], index: 2, kind: input, shape index: {}]
  %s3 = inlined_call_operand.vmem [shape: bf16[8,36], index: 3, kind: input, shape index: {}]
  %s4 = inlined_call_operand.vmem [shape: f32[8,1], index: 4, kind: input, shape index: {}]
  %s5 = inlined_call_operand.vmem [shape: f32[256,64], index: 5, kind: input, shape index: {}]
  %s6 = inlined_call_operand.hbm [shape: f32[2,8,64], index: 6, kind: output, shape index: {}]
  %s7 = sld [smem:[#allocation0]]
  $region57: #{tpu_custom_call.1} parent=0
    _
  %s9 = ssub.s32 1, %s7
  %s10 = scalar_select 0, %s9, %s7
  $region1: #{tpu_custom_call.1} parent=0
    #allocation2 [shape = 'u8[8192]{0}', space=vmem, size = 0x2000, scoped, tag = 'output window, operand 0']
    #allocation3 [shape = 's32[2]{0}', space=sflag, size = 0x8, scoped, tag = 'scoped memory for tpu_custom_call.1']
    %11 = vsyncpa [#allocation3], 0
    %s12 = scalar_lea.sflag [#allocation3], 1
    %13 = vsyncpa %s12, 0
    loop: start=0, step=1, limit=4
    $region2: #{tpu_custom_call.1} parent=1 // loop_pre_header
      _
    $region3: #{tpu_custom_call.1} parent=1 // loop_header
      %s15 = sphi 0, %s19
      %p16 = scmp.ge.s32.totalorder %s15, 4
      %s25 = sphi 0, %s27
      %s28 = sphi 0, %s25
      %s29 = sphi 0, %s28
      %s45 = sphi 0, %s29
      %s49 = sphi 0, %s49
      %s51 = sphi 0, %s49
      %s52 = sphi 0, %s51
      %s66 = sphi 0, %s52
      %s70 = sphi 0, %s70
      %s72 = sphi 0, %s70
      %s73 = sphi 0, %s72
      %s87 = sphi 0, %s73
      %s91 = sphi 0, %s91
      %s93 = sphi 0, %s91
      %s94 = sphi 0, %s93
      %s108 = sphi 0, %s94
      %s112 = sphi 0, %s112
      %s114 = sphi 0, %s112
      %s115 = sphi 0, %s114
      %s129 = sphi 0, %s115
      %s133 = sphi 0, %s133
      %s135 = sphi 0, %s133
      %s136 = sphi 0, %s135
      %s150 = sphi 0, %s136
      %s156 = sphi 0, %s158
      %s159 = sphi 0, %s156
      %s160 = sphi 0, %s159
      %s176 = sphi 0, %s160
    $region4: #{tpu_custom_call.1} parent=1 // loop_header_branch
      %18 = sbr.rel (%p16) target = $region8
    $region5: #{tpu_custom_call.1} parent=1 // loop_body
      %s20 = ssub.s32 %s15, 1
      %s21 = ssub.s32 %s15, 2
      %s22 = sadd.s32 %s15, 1
      %s23 = ssub.s32 %s15, %s22
      %p24 = scmp.eq.s32.totalorder %s23, 0
      %s26 = sadd.s32 %s25, 1
      %s27 = scalar_select %p24, %s25, %s26
      %p30 = pneg %p24
      %p31 = scmp.eq.s32.totalorder %s15, 1
      %p32 = por %p30, %p31
      %p33 = scmp.ne.s32.totalorder %s25, %s28
      %p34 = scmp.eq.s32.totalorder %s15, 0
      %p35 = por %p33, %p34
      %p36 = scmp.ne.s32.totalorder %s25, %s28
      %p37 = scmp.eq.s32.totalorder %s20, 1
      %p38 = por %p36, %p37
      %p39 = scmp.ne.s32.totalorder %s28, %s29
      %p40 = scmp.eq.s32.totalorder %s20, 0
      %p41 = por %p39, %p40
      %p42 = scmp.ne.s32.totalorder %s28, %s29
      %p43 = scmp.eq.s32.totalorder %s21, 1
      %p44 = por %p42, %p43
      %p46 = scmp.ne.s32.totalorder %s29, %s45
      %p47 = scmp.eq.s32.totalorder %s21, 0
      %p48 = por %p46, %p47
      %s50 = sadd.s32 %s49, 1
      %p53 = scmp.eq.s32.totalorder %s15, 1
      %p54 = scmp.ne.s32.totalorder %s49, %s51
      %p55 = scmp.eq.s32.totalorder %s15, 0
      %p56 = por %p54, %p55
      %p57 = scmp.ne.s32.totalorder %s49, %s51
      %p58 = scmp.eq.s32.totalorder %s20, 1
      %p59 = por %p57, %p58
      %p60 = scmp.ne.s32.totalorder %s51, %s52
      %p61 = scmp.eq.s32.totalorder %s20, 0
      %p62 = por %p60, %p61
      %p63 = scmp.ne.s32.totalorder %s51, %s52
      %p64 = scmp.eq.s32.totalorder %s21, 1
      %p65 = por %p63, %p64
      %p67 = scmp.ne.s32.totalorder %s52, %s66
      %p68 = scmp.eq.s32.totalorder %s21, 0
      %p69 = por %p67, %p68
      %s71 = sadd.s32 %s70, 1
      %p74 = scmp.eq.s32.totalorder %s15, 1
      %p75 = scmp.ne.s32.totalorder %s70, %s72
      %p76 = scmp.eq.s32.totalorder %s15, 0
      %p77 = por %p75, %p76
      %p78 = scmp.ne.s32.totalorder %s70, %s72
      %p79 = scmp.eq.s32.totalorder %s20, 1
      %p80 = por %p78, %p79
      %p81 = scmp.ne.s32.totalorder %s72, %s73
      %p82 = scmp.eq.s32.totalorder %s20, 0
      %p83 = por %p81, %p82
      %p84 = scmp.ne.s32.totalorder %s72, %s73
      %p85 = scmp.eq.s32.totalorder %s21, 1
      %p86 = por %p84, %p85
      %p88 = scmp.ne.s32.totalorder %s73, %s87
      %p89 = scmp.eq.s32.totalorder %s21, 0
      %p90 = por %p88, %p89
      %s92 = sadd.s32 %s91, 1
      %p95 = scmp.eq.s32.totalorder %s15, 1
      %p96 = scmp.ne.s32.totalorder %s91, %s93
      %p97 = scmp.eq.s32.totalorder %s15, 0
      %p98 = por %p96, %p97
      %p99 = scmp.ne.s32.totalorder %s91, %s93
      %p100 = scmp.eq.s32.totalorder %s20, 1
      %p101 = por %p99, %p100
      %p102 = scmp.ne.s32.totalorder %s93, %s94
      %p103 = scmp.eq.s32.totalorder %s20, 0
      %p104 = por %p102, %p103
      %p105 = scmp.ne.s32.totalorder %s93, %s94
      %p106 = scmp.eq.s32.totalorder %s21, 1
      %p107 = por %p105, %p106
      %p109 = scmp.ne.s32.totalorder %s94, %s108
      %p110 = scmp.eq.s32.totalorder %s21, 0
      %p111 = por %p109, %p110
      %s113 = sadd.s32 %s112, 1
      %p116 = scmp.eq.s32.totalorder %s15, 1
      %p117 = scmp.ne.s32.totalorder %s112, %s114
      %p118 = scmp.eq.s32.totalorder %s15, 0
      %p119 = por %p117, %p118
      %p120 = scmp.ne.s32.totalorder %s112, %s114
      %p121 = scmp.eq.s32.totalorder %s20, 1
      %p122 = por %p120, %p121
      %p123 = scmp.ne.s32.totalorder %s114, %s115
      %p124 = scmp.eq.s32.totalorder %s20, 0
      %p125 = por %p123, %p124
      %p126 = scmp.ne.s32.totalorder %s114, %s115
      %p127 = scmp.eq.s32.totalorder %s21, 1
      %p128 = por %p126, %p127
      %p130 = scmp.ne.s32.totalorder %s115, %s129
      %p131 = scmp.eq.s32.totalorder %s21, 0
      %p132 = por %p130, %p131
      %s134 = sadd.s32 %s133, 1
      %p137 = scmp.eq.s32.totalorder %s15, 1
      %p138 = scmp.ne.s32.totalorder %s133, %s135
      %p139 = scmp.eq.s32.totalorder %s15, 0
      %p140 = por %p138, %p139
      %p141 = scmp.ne.s32.totalorder %s133, %s135
      %p142 = scmp.eq.s32.totalorder %s20, 1
      %p143 = por %p141, %p142
      %p144 = scmp.ne.s32.totalorder %s135, %s136
      %p145 = scmp.eq.s32.totalorder %s20, 0
      %p146 = por %p144, %p145
      %p147 = scmp.ne.s32.totalorder %s135, %s136
      %p148 = scmp.eq.s32.totalorder %s21, 1
      %p149 = por %p147, %p148
      %p151 = scmp.ne.s32.totalorder %s136, %s150
      %p152 = scmp.eq.s32.totalorder %s21, 0
      %p153 = por %p151, %p152
      %s154 = ssub.s32 %s15, %s22
      %p155 = scmp.eq.s32.totalorder %s154, 0
      %s157 = sadd.s32 %s156, 1
      %s158 = scalar_select %p155, %s156, %s157
      %p161 = pneg %p155
      %p162 = scmp.eq.s32.totalorder %s15, 1
      %p163 = por %p161, %p162
      %p164 = scmp.ne.s32.totalorder %s156, %s159
      %p165 = scmp.eq.s32.totalorder %s15, 0
      %p166 = por %p164, %p165
      %p167 = scmp.ne.s32.totalorder %s156, %s159
      %p168 = scmp.eq.s32.totalorder %s20, 1
      %p169 = por %p167, %p168
      %p170 = scmp.ne.s32.totalorder %s159, %s160
      %p171 = scmp.eq.s32.totalorder %s20, 0
      %p172 = por %p170, %p171
      %p173 = scmp.ne.s32.totalorder %s159, %s160
      %p174 = scmp.eq.s32.totalorder %s21, 1
      %p175 = por %p173, %p174
      %p177 = scmp.ne.s32.totalorder %s160, %s176
      %p178 = scmp.eq.s32.totalorder %s21, 0
      %p179 = por %p177, %p178
      %p180 = scmp.le.s32.totalorder 1, %s15
      %p181 = scmp.lt.s32.totalorder %s15, 3
      %p182 = pnand %p180, %p181
      %p183 = pneg %p182
      // Predicated region
      $region9: #{tpu_custom_call.1} parent=5 // pred_check
        _
      $region10: #{tpu_custom_call.1} parent=5 // pred_check_branch
        %185 = sbr.rel (%p182) target = $region12
      $region11: #{tpu_custom_call.1} parent=5 // pred_region
        %s186 = ssub.s32 %s15, 1
        // Predicated region
        $region13: #{tpu_custom_call.1} parent=11 // pred_check
          %p187 = pneg %p62
        $region14: #{tpu_custom_call.1} parent=11 // pred_check_branch
          %189 = sbr.rel (%p187) target = $region16
        $region15: #{tpu_custom_call.1} parent=11 // pred_region
          _
        $region16: #{tpu_custom_call.1} parent=11 // pred_fallthru
          _
        // Predicated region
        $region17: #{tpu_custom_call.1} parent=11 // pred_check
          %p190 = pneg %p83
        $region18: #{tpu_custom_call.1} parent=11 // pred_check_branch
          %192 = sbr.rel (%p190) target = $region20
        $region19: #{tpu_custom_call.1} parent=11 // pred_region
          _
        $region20: #{tpu_custom_call.1} parent=11 // pred_fallthru
          _
        // Predicated region
        $region21: #{tpu_custom_call.1} parent=11 // pred_check
          %p193 = pneg %p104
        $region22: #{tpu_custom_call.1} parent=11 // pred_check_branch
          %195 = sbr.rel (%p193) target = $region24
        $region23: #{tpu_custom_call.1} parent=11 // pred_region
          _
        $region24: #{tpu_custom_call.1} parent=11 // pred_fallthru
          _
        // Predicated region
        $region25: #{tpu_custom_call.1} parent=11 // pred_check
          %p196 = pneg %p125
        $region26: #{tpu_custom_call.1} parent=11 // pred_check_branch
          %198 = sbr.rel (%p196) target = $region28
        $region27: #{tpu_custom_call.1} parent=11 // pred_region
          _
        $region28: #{tpu_custom_call.1} parent=11 // pred_fallthru
          _
        // Predicated region
        $region29: #{tpu_custom_call.1} parent=11 // pred_check
          %p199 = pneg %p146
        $region30: #{tpu_custom_call.1} parent=11 // pred_check_branch
          %201 = sbr.rel (%p199) target = $region32
        $region31: #{tpu_custom_call.1} parent=11 // pred_region
          _
        $region32: #{tpu_custom_call.1} parent=11 // pred_fallthru
          _
      $region12: #{tpu_custom_call.1} parent=5 // pred_fallthru
        _
      %p202 = scmp.lt.s32.totalorder %s15, 2
      // Predicated region
      $region33: #{tpu_custom_call.1} parent=5 // pred_check
        %p203 = pneg %p202
      $region34: #{tpu_custom_call.1} parent=5 // pred_check_branch
        %205 = sbr.rel (%p203) target = $region36
      $region35: #{tpu_custom_call.1} parent=5 // pred_region
        // Predicated region
        $region37: #{tpu_custom_call.1} parent=35 // pred_check
          %p206 = pneg %p35
        $region38: #{tpu_custom_call.1} parent=35 // pred_check_branch
          %208 = sbr.rel (%p206) target = $region40
        $region39: #{tpu_custom_call.1} parent=35 // pred_region
          %p209 = scmp.lt.s32.totalorder %s15, 1
          %s210 = scalar_select %p209, %s15, 1
          %s211 = smul.addr %s210, 2
          %s212 = smul.addr %s211, 2
          %s213 = scalar_lea.vmem %s0, %s212
        $region40: #{tpu_custom_call.1} parent=35 // pred_fallthru
          _
      $region36: #{tpu_custom_call.1} parent=5 // pred_fallthru
        _
      %p214 = scmp.le.s32.totalorder 1, %s15
      %p215 = scmp.lt.s32.totalorder %s15, 3
      %p216 = pnand %p214, %p215
      %p217 = pneg %p216
      // Predicated region
      $region41: #{tpu_custom_call.1} parent=5 // pred_check
        _
      $region42: #{tpu_custom_call.1} parent=5 // pred_check_branch
        %219 = sbr.rel (%p216) target = $region44
      $region43: #{tpu_custom_call.1} parent=5 // pred_region
        %s220 = ssub.s32 %s15, 1
        %p221 = scmp.lt.s32.totalorder %s20, 1
        %s222 = scalar_select %p221, %s20, 1
        %s223 = smul.addr %s222, 2
        %s224 = smul.addr %s223, 2
        %s225 = scalar_lea.vmem %s0, %s224
        %p226 = pneg %p41
        %p227 = pneg %p38
        %p228 = pneg %p62
        %p229 = pneg %p59
        %p230 = pneg %p83
        %p231 = pneg %p80
        %p232 = pneg %p104
        %p233 = pneg %p101
        %p234 = pneg %p125
        %p235 = pneg %p122
        %p236 = pneg %p146
        %p237 = pneg %p143
        %p238 = pneg %p172
        %p239 = pneg %p169
        %s240 = sand.u32 %s159, 1
        %s241 = scalar_lea.sflag [#allocation3], %s240
        %s242 = sand.u32 %s159, 1
        %s243 = smul.addr %s242, 8
        %s244 = scalar_lea.vmem [#allocation2], %s243
        %p245 = scmp.lt.s32.totalorder %s20, 1
        %s246 = scalar_select %p245, %s20, 1
        %s247 = smul.addr %s246, 2
        %s248 = smul.addr %s247, 2
        %s249 = scalar_lea.vmem %s0, %s248
        %v253 = vlaneseq
        %v254 = vand.u32 %v253, 127
        %v255 = vadd.s32 %v254, 128
        %vm256 = vcmp.lt.s32.totalorder %v254, 0
        %v257 = vsub.s32 0, %v254
        %v258 = vsel %vm256, %v257, %v254
        %v259 = vshrl.u32 %v258, 4
        %v260 = vand.u32 %v258, 15
        %v261 = vsub.s32 0, %v260
        %v262 = vsel %vm256, %v261, %v260
        %vm263 = vcmp.lt.s32.totalorder %v255, 0
        %v264 = vsub.s32 0, %v255
        %v265 = vsel %vm263, %v264, %v255
        %v266 = vshrl.u32 %v265, 4
        %v267 = vand.u32 %v265, 15
        %v268 = vsub.s32 0, %v267
        %v269 = vsel %vm263, %v268, %v267
        %vm270 = vcmp.ne.s32.totalorder %v262, 0
        %vm271 = vcmp.ne.s32.totalorder %v269, 0
        %vm272 = vcmp.lt.s32.totalorder %v262, 0
        %vm273 = vcmp.lt.s32.totalorder %v269, 0
        %vm274 = vmand %vm272, %vm270
        %vm275 = vmand %vm273, %vm271
        %v276 = vadd.s32 %v262, 16
        %v277 = vadd.s32 %v269, 16
        %v278 = vsel %vm274, %v276, %v262
        %v279 = vsel %vm275, %v277, %v269
        %vm280 = vcmp.ge.s32.totalorder %v278, 1
        %vm281 = vcmp.ge.s32.totalorder %v279, 1
        %vm282 = vcmp.le.s32.totalorder %v278, 14
        %vm283 = vcmp.le.s32.totalorder %v279, 14
        %v284 = vld [vmem:[%s249] sm:$0xf]
        %v287 = vunpack.c.l.s4 1983009808
        %v288 = vunpack.c.0.s8 %v287
        %v289 = vlaneseq
        %v290 = vshrl.u32 %v289, 7
        %v291 = vsub.s32 %v288, %v290
        %v292 = vrot.slane %v284, %v291
        %v293 = vcombine.high %v292, %v292
        %294 = vrot.lane.b32.xlu0 %v292, 17
        %v295 = vpop.permute.xlu0 %294
        %296 = vrot.lane.b32.xlu0 %v293, 17
        %v297 = vpop.permute.xlu0 %296
        %vm298 = vcmask 138240
        %v299 = vsel %vm298, %v295, %v297
        %vm301 = vcmask 138240
        %v304 = vsel %vm301, 0, %v295
        %v306 = vsel %vm280, 1, 0
        %v307 = vsel %vm281, 1, 0
        %vm308 = vcmp.eq.s32.totalorder %v306, 1
        %vm309 = vcmp.eq.s32.totalorder %v307, 1
        %vm310 = vmpackc.low %vm309, %vm308
        %v311 = vsel %vm310, 65537, 0
        %v312 = vlaneseq
        %v313 = vshrl.u32 %v312, 7
        %v314 = vsub.s32 0, %v313
        %v315 = vrot.slane %v311, %v314
        %v316 = vlaneseq
        %v317 = vshrl.u32 %v316, 7
        %v318 = vsub.s32 4, %v317
        %v319 = vrot.slane %v311, %v318
        %vm320 = vcmp.ne.s16.totalorder %v315, 0
        %vm321 = vcmp.ne.s16.totalorder %v319, 0
        %v322 = vsel %vm320, %v304, 0
        %v323 = vsel %vm321, %v299, 0
        %324 = vrot.lane.b32.xlu0 %v292, 16
        %v325 = vpop.permute.xlu0 %324
        %326 = vrot.lane.b32.xlu0 %v293, 16
        %v327 = vpop.permute.xlu0 %326
        %vm328 = vcmask 130048
        %v329 = vsel %vm328, %v325, %v327
        %vm330 = vcmask 130048
        %v332 = vsel %vm330, 0, %v325
        %333 = vrot.lane.b32.xlu0 %v292, 15
        %v334 = vpop.permute.xlu0 %333
        %335 = vrot.lane.b32.xlu0 %v293, 15
        %v336 = vpop.permute.xlu0 %335
        %vm337 = vcmask 121856
        %v338 = vsel %vm337, %v334, %v336
        %vm340 = vcmask 121856
        %v342 = vsel %vm340, 0, %v334
        %v344 = vsel %vm282, 1, 0
        %v345 = vsel %vm283, 1, 0
        %vm346 = vcmp.eq.s32.totalorder %v344, 1
        %vm347 = vcmp.eq.s32.totalorder %v345, 1
        %vm348 = vmpackc.low %vm347, %vm346
        %v349 = vsel %vm348, 65537, 0
        %v350 = vlaneseq
        %v351 = vshrl.u32 %v350, 7
        %v352 = vsub.s32 0, %v351
        %v353 = vrot.slane %v349, %v352
        %v354 = vlaneseq
        %v355 = vshrl.u32 %v354, 7
        %v356 = vsub.s32 4, %v355
        %v357 = vrot.slane %v349, %v356
        %vm358 = vcmp.ne.s16.totalorder %v353, 0
        %vm359 = vcmp.ne.s16.totalorder %v357, 0
        %v360 = vsel %vm358, %v342, 0
        %v361 = vsel %vm359, %v338, 0
        %362 = vrot.lane.b32.xlu0 %v292, 1
        %v363 = vpop.permute.xlu0 %362
        %364 = vrot.lane.b32.xlu0 %v293, 1
        %v365 = vpop.permute.xlu0 %364
        %vm366 = vcmask 7168
        %v367 = vsel %vm366, %v363, %v365
        %vm369 = vcmask 7168
        %v371 = vsel %vm369, 0, %v363
        %v373 = vsel %vm320, %v371, 0
        %v374 = vsel %vm321, %v367, 0
        %375 = vrot.lane.b32.xlu0 %v292, 127
        %v376 = vpop.permute.xlu0 %375
        %377 = vrot.lane.b32.xlu0 %v293, 127
        %v378 = vpop.permute.xlu0 %377
        %vm379 = vcmask 1039360
        %v380 = vsel %vm379, %v376, %v378
        %vm382 = vcmask 1039360
        %v384 = vsel %vm382, %v378, 0
        %v386 = vsel %vm358, %v380, 0
        %v387 = vsel %vm359, %v384, 0
        %388 = vrot.lane.b32.xlu0 %v292, 113
        %v389 = vpop.permute.xlu0 %388
        %390 = vrot.lane.b32.xlu0 %v293, 113
        %v391 = vpop.permute.xlu0 %390
        %vm392 = vcmask 924672
        %v393 = vsel %vm392, %v389, %v391
        %vm395 = vcmask 924672
        %v397 = vsel %vm395, %v391, 0
        %v399 = vsel %vm320, %v393, 0
        %v400 = vsel %vm321, %v397, 0
        %401 = vrot.lane.b32.xlu0 %v292, 112
        %v402 = vpop.permute.xlu0 %401
        %403 = vrot.lane.b32.xlu0 %v293, 112
        %v404 = vpop.permute.xlu0 %403
        %vm405 = vcmask 916480
        %v406 = vsel %vm405, %v402, %v404
        %vm407 = vcmask 916480
        %v409 = vsel %vm407, %v404, 0
        %410 = vrot.lane.b32.xlu0 %v292, 111
        %v411 = vpop.permute.xlu0 %410
        %412 = vrot.lane.b32.xlu0 %v293, 111
        %v413 = vpop.permute.xlu0 %412
        %vm414 = vcmask 908288
        %v415 = vsel %vm414, %v411, %v413
        %vm417 = vcmask 908288
        %v419 = vsel %vm417, %v413, 0
        %v421 = vsel %vm358, %v415, 0
        %v422 = vsel %vm359, %v419, 0
        %v424 = vrot.slane %v332, 6
        %v425 = vrot.slane %v329, 6
        %v428 = vrot.slane %v360, 4
        %v429 = vrot.slane %v361, 4
        %v432 = vrot.slane %v373, 2
        %v433 = vrot.slane %v374, 2
        %v436 = vrot.slane %v386, 6
        %v437 = vrot.slane %v387, 6
        %v440 = vrot.slane %v399, 4
        %v441 = vrot.slane %v400, 4
        %v443 = vrot.slane %v406, 2
        %v444 = vrot.slane %v409, 2
        %vm445 = vcmask 1041408
        %v448 = vsel %vm445, %v322, %v424
        %v451 = vsel %vm445, %v323, %v425
        %vm452 = vcmask 1043456
        %v454 = vsel %vm452, %v448, %v428
        %v456 = vsel %vm452, %v451, %v429
        %vm457 = vcmask 1045504
        %v459 = vsel %vm457, %v454, %v432
        %v462 = vsel %vm457, %v456, %v433
        %v466 = vsel %vm445, %v292, %v436
        %v469 = vsel %vm445, %v293, %v437
        %v471 = vsel %vm452, %v466, %v440
        %v473 = vsel %vm452, %v469, %v441
        %v475 = vsel %vm457, %v471, %v443
        %v478 = vsel %vm457, %v473, %v444
        %v480 = vld [vmem:[%s1] sm:$0x3]
        %v481 = vld [vmem:[%s2] sm:$0xf]
        %483 = vset.pattern.permute.xlu0 0
        %484 = vperm.xlu0 %483, %v481
        %v485 = vpop.permute.xlu0 %484
        %vm487 = vcmask 293888
        %v489 = vsel %vm487, %v480, 0
        %v492 = vsel %vm445, %v421, 0
        %v495 = vsel %vm445, %v422, 0
        %497 = vmatprep.subr.bf16.mxu0 %v462
        %498 = vmatpush1.bf16.msra.mxu0 %v459
        %499 = vmatprep.subr.bf16.mxu0 %v478
        %500 = vmatpush1.bf16.msra.mxu0 %v475
        %501 = vmatprep.subr.bf16.mxu0 %v495
        %502 = vmatpush1.bf16.msra.mxu0 %v492
        %503 = vmatprep.subr.bf16.mxu0 0
        %504 = vmatpush1.bf16.msra.mxu0 0
        %505 = vmatprep.subr.bf16.mxu0 0
        %506 = vmatpush1.bf16.msra.mxu0 0
        %507 = vmatprep.subr.bf16.mxu0 0
        %508 = vmatpush1.bf16.msra.mxu0 0
        %509 = vmatprep.subr.bf16.mxu0 0
        %510 = vmatpush1.bf16.msra.mxu0 0
        %511 = vmatprep.subr.bf16.mxu0 0
        %512 = vmatpush1.bf16.msra.mxu0 0
        %513 = vmatprep.subr.bf16.mxu0 0
        %514 = vmatpush1.bf16.msra.mxu0 0
        %515 = vmatprep.subr.bf16.mxu0 0
        %516 = vmatpush1.bf16.msra.mxu0 0
        %517 = vmatprep.subr.bf16.mxu0 0
        %518 = vmatpush1.bf16.msra.mxu0 0
        %519 = vmatprep.subr.bf16.mxu0 0
        %520 = vmatpush1.bf16.msra.mxu0 0
        %521 = vmatprep.subr.bf16.mxu0 0
        %522 = vmatpush1.bf16.msra.mxu0 0
        %523 = vmatprep.subr.bf16.mxu0 0
        %524 = vmatpush1.bf16.msra.mxu0 0
        %525 = vmatprep.subr.bf16.mxu0 0
        %526 = vmatpush1.bf16.msra.mxu0 0
        %527 = vmatprep.subr.bf16.mxu0 0
        %528 = vmatpush1.bf16.msra.mxu0 0
        %529 = vmatprep.mubr.bf16.mxu0 0
        %530 = vmatmul.mubr.bf16.gmra.mrb[0].mxu0 %v489
        %v531 = vpop.f32.mrb[0].mxu0
        %v532 = vadd.f32 %v485, %v531
        %v533 = vpop.f32.mrb[0].mxu0
        %v534 = vadd.f32 %v485, %v533
        %v535 = vpop.f32.mrb[0].mxu0
        %v536 = vpop.f32.mrb[0].mxu0
        %537 = vdwg.mxu0
        %vm538 = vcmp.gt.f32.partialorder %v532, 0.0
        %vm539 = vcmp.gt.f32.partialorder %v534, 0.0
        %v540 = vmul.f32 %v532, 0.2
        %v541 = vmul.f32 %v534, 0.2
        %v542 = vsel %vm538, %v532, %v540
        %v543 = vsel %vm539, %v534, %v541
        %v544 = vpack.c.bf16 %v542, %v542
        %v545 = vpack.c.bf16 %v543, %v543
        %548 = vrot.lane.b32.xlu0 %v544, 17
        %v549 = vpop.permute.xlu0 %548
        %550 = vrot.lane.b32.xlu0 %v545, 17
        %v551 = vpop.permute.xlu0 %550
        %v552 = vsel %vm298, %v549, %v551
        %v555 = vsel %vm301, 0, %v549
        %v557 = vsel %vm320, %v555, 0
        %v558 = vsel %vm321, %v552, 0
        %559 = vrot.lane.b32.xlu0 %v544, 16
        %v560 = vpop.permute.xlu0 %559
        %561 = vrot.lane.b32.xlu0 %v545, 16
        %v562 = vpop.permute.xlu0 %561
        %v563 = vsel %vm328, %v560, %v562
        %v565 = vsel %vm330, 0, %v560
        %566 = vrot.lane.b32.xlu0 %v544, 15
        %v567 = vpop.permute.xlu0 %566
        %568 = vrot.lane.b32.xlu0 %v545, 15
        %v569 = vpop.permute.xlu0 %568
        %v570 = vsel %vm337, %v567, %v569
        %v573 = vsel %vm340, 0, %v567
        %v575 = vsel %vm358, %v573, 0
        %v576 = vsel %vm359, %v570, 0
        %577 = vrot.lane.b32.xlu0 %v544, 1
        %v578 = vpop.permute.xlu0 %577
        %579 = vrot.lane.b32.xlu0 %v545, 1
        %v580 = vpop.permute.xlu0 %579
        %v581 = vsel %vm366, %v578, %v580
        %v584 = vsel %vm369, 0, %v578
        %v586 = vsel %vm320, %v584, 0
        %v587 = vsel %vm321, %v581, 0
        %588 = vrot.lane.b32.xlu0 %v544, 127
        %v589 = vpop.permute.xlu0 %588
        %590 = vrot.lane.b32.xlu0 %v545, 127
        %v591 = vpop.permute.xlu0 %590
        %v592 = vsel %vm379, %v589, %v591
        %v595 = vsel %vm382, %v591, 0
        %v597 = vsel %vm358, %v592, 0
        %v598 = vsel %vm359, %v595, 0
        %599 = vrot.lane.b32.xlu0 %v544, 113
        %v600 = vpop.permute.xlu0 %599
        %601 = vrot.lane.b32.xlu0 %v545, 113
        %v602 = vpop.permute.xlu0 %601
        %v603 = vsel %vm392, %v600, %v602
        %v606 = vsel %vm395, %v602, 0
        %v608 = vsel %vm320, %v603, 0
        %v609 = vsel %vm321, %v606, 0
        %610 = vrot.lane.b32.xlu0 %v544, 112
        %v611 = vpop.permute.xlu0 %610
        %612 = vrot.lane.b32.xlu0 %v545, 112
        %v613 = vpop.permute.xlu0 %612
        %v614 = vsel %vm405, %v611, %v613
        %v616 = vsel %vm407, %v613, 0
        %617 = vrot.lane.b32.xlu0 %v544, 111
        %v618 = vpop.permute.xlu0 %617
        %619 = vrot.lane.b32.xlu0 %v545, 111
        %v620 = vpop.permute.xlu0 %619
        %v621 = vsel %vm414, %v618, %v620
        %v624 = vsel %vm417, %v620, 0
        %v626 = vsel %vm358, %v621, 0
        %v627 = vsel %vm359, %v624, 0
        %v629 = vrot.slane %v565, 6
        %v630 = vrot.slane %v563, 6
        %v633 = vrot.slane %v575, 4
        %v634 = vrot.slane %v576, 4
        %v637 = vrot.slane %v586, 2
        %v638 = vrot.slane %v587, 2
        %v641 = vrot.slane %v597, 6
        %v642 = vrot.slane %v598, 6
        %v645 = vrot.slane %v608, 4
        %v646 = vrot.slane %v609, 4
        %v648 = vrot.slane %v614, 2
        %v649 = vrot.slane %v616, 2
        %v652 = vsel %vm445, %v557, %v629
        %v655 = vsel %vm445, %v558, %v630
        %v657 = vsel %vm452, %v652, %v633
        %v659 = vsel %vm452, %v655, %v634
        %v661 = vsel %vm457, %v657, %v637
        %v664 = vsel %vm457, %v659, %v638
        %v668 = vsel %vm445, %v544, %v641
        %v671 = vsel %vm445, %v545, %v642
        %v673 = vsel %vm452, %v668, %v645
        %v675 = vsel %vm452, %v671, %v646
        %v677 = vsel %vm457, %v673, %v648
        %v680 = vsel %vm457, %v675, %v649
        %v682 = vld [vmem:[%s3] sm:$0xf]
        %v683 = vld [vmem:[%s4] sm:$0xff]
        %685 = vset.pattern.permute.xlu0 0
        %686 = vperm.xlu0 %685, %v683
        %v687 = vpop.permute.xlu0 %686
        %v690 = vsel %vm487, %v682, 0
        %v693 = vsel %vm445, %v626, 0
        %v696 = vsel %vm445, %v627, 0
        %698 = vmatprep.subr.bf16.mxu0 %v664
        %699 = vmatpush1.bf16.msra.mxu0 %v661
        %700 = vmatprep.subr.bf16.mxu0 %v680
        %701 = vmatpush1.bf16.msra.mxu0 %v677
        %702 = vmatprep.subr.bf16.mxu0 %v696
        %703 = vmatpush1.bf16.msra.mxu0 %v693
        %704 = vmatprep.subr.bf16.mxu0 0
        %705 = vmatpush1.bf16.msra.mxu0 0
        %706 = vmatprep.subr.bf16.mxu0 0
        %707 = vmatpush1.bf16.msra.mxu0 0
        %708 = vmatprep.subr.bf16.mxu0 0
        %709 = vmatpush1.bf16.msra.mxu0 0
        %710 = vmatprep.subr.bf16.mxu0 0
        %711 = vmatpush1.bf16.msra.mxu0 0
        %712 = vmatprep.subr.bf16.mxu0 0
        %713 = vmatpush1.bf16.msra.mxu0 0
        %714 = vmatprep.subr.bf16.mxu0 0
        %715 = vmatpush1.bf16.msra.mxu0 0
        %716 = vmatprep.subr.bf16.mxu0 0
        %717 = vmatpush1.bf16.msra.mxu0 0
        %718 = vmatprep.subr.bf16.mxu0 0
        %719 = vmatpush1.bf16.msra.mxu0 0
        %720 = vmatprep.subr.bf16.mxu0 0
        %721 = vmatpush1.bf16.msra.mxu0 0
        %722 = vmatprep.subr.bf16.mxu0 0
        %723 = vmatpush1.bf16.msra.mxu0 0
        %724 = vmatprep.subr.bf16.mxu0 0
        %725 = vmatpush1.bf16.msra.mxu0 0
        %726 = vmatprep.subr.bf16.mxu0 0
        %727 = vmatpush1.bf16.msra.mxu0 0
        %728 = vmatprep.subr.bf16.mxu0 0
        %729 = vmatpush1.bf16.msra.mxu0 0
        %730 = vmatprep.mubr.bf16.mxu0 0
        %731 = vmatmul.mubr.bf16.gmra.mrb[0].mxu0 %v690
        %v732 = vpop.f32.mrb[0].mxu0
        %v733 = vadd.f32 %v687, %v732
        %v734 = vpop.f32.mrb[0].mxu0
        %v735 = vadd.f32 %v687, %v734
        %v736 = vpop.f32.mrb[0].mxu0
        %v737 = vpop.f32.mrb[0].mxu0
        %738 = vdwg.mxu0
        %vm739 = vcmp.gt.f32.partialorder %v733, 0.0
        %vm740 = vcmp.gt.f32.partialorder %v735, 0.0
        %v741 = vmul.f32 %v733, 0.2
        %v742 = vmul.f32 %v735, 0.2
        %v743 = vsel %vm739, %v733, %v741
        %v744 = vsel %vm740, %v735, %v742
        %v745 = vld [vmem:[%s5] sm:$0xff]
        %v746 = vld [vmem:[%s5 + $0x8] sm:$0xff]
        %v747 = vld [vmem:[%s5 + $0x10] sm:$0xff]
        %v748 = vld [vmem:[%s5 + $0x18] sm:$0xff]
        %v749 = vld [vmem:[%s5 + $0x20] sm:$0xff]
        %v750 = vld [vmem:[%s5 + $0x28] sm:$0xff]
        %v751 = vld [vmem:[%s5 + $0x30] sm:$0xff]
        %v752 = vld [vmem:[%s5 + $0x38] sm:$0xff]
        %v753 = vld [vmem:[%s5 + $0x40] sm:$0xff]
        %v754 = vld [vmem:[%s5 + $0x48] sm:$0xff]
        %v755 = vld [vmem:[%s5 + $0x50] sm:$0xff]
        %v756 = vld [vmem:[%s5 + $0x58] sm:$0xff]
        %v757 = vld [vmem:[%s5 + $0x60] sm:$0xff]
        %v758 = vld [vmem:[%s5 + $0x68] sm:$0xff]
        %v759 = vld [vmem:[%s5 + $0x70] sm:$0xff]
        %v760 = vld [vmem:[%s5 + $0x78] sm:$0xff]
        %v761 = vld [vmem:[%s5 + $0x80] sm:$0xff]
        %v762 = vld [vmem:[%s5 + $0x88] sm:$0xff]
        %v763 = vld [vmem:[%s5 + $0x90] sm:$0xff]
        %v764 = vld [vmem:[%s5 + $0x98] sm:$0xff]
        %v765 = vld [vmem:[%s5 + $0xa0] sm:$0xff]
        %v766 = vld [vmem:[%s5 + $0xa8] sm:$0xff]
        %v767 = vld [vmem:[%s5 + $0xb0] sm:$0xff]
        %v768 = vld [vmem:[%s5 + $0xb8] sm:$0xff]
        %v769 = vld [vmem:[%s5 + $0xc0] sm:$0xff]
        %v770 = vld [vmem:[%s5 + $0xc8] sm:$0xff]
        %v771 = vld [vmem:[%s5 + $0xd0] sm:$0xff]
        %v772 = vld [vmem:[%s5 + $0xd8] sm:$0xff]
        %v773 = vld [vmem:[%s5 + $0xe0] sm:$0xff]
        %v774 = vld [vmem:[%s5 + $0xe8] sm:$0xff]
        %v775 = vld [vmem:[%s5 + $0xf0] sm:$0xff]
        %v776 = vld [vmem:[%s5 + $0xf8] sm:$0xff]
        %777 = vmatprep.subr.mxu0 0.0
        %778 = vmatpush1.msra.mxu0 %v745
        %779 = vmatprep.subr.mxu0 0.0
        %780 = vmatpush1.msra.mxu0 %v746
        %781 = vmatprep.subr.mxu0 0.0
        %782 = vmatpush1.msra.mxu0 %v747
        %783 = vmatprep.subr.mxu0 0.0
        %784 = vmatpush1.msra.mxu0 %v748
        %785 = vmatprep.subr.mxu0 0.0
        %786 = vmatpush1.msra.mxu0 %v749
        %787 = vmatprep.subr.mxu0 0.0
        %788 = vmatpush1.msra.mxu0 %v750
        %789 = vmatprep.subr.mxu0 0.0
        %790 = vmatpush1.msra.mxu0 %v751
        %791 = vmatprep.subr.mxu0 0.0
        %792 = vmatpush1.msra.mxu0 %v752
        %793 = vmatprep.subr.mxu0 0.0
        %794 = vmatpush1.msra.mxu0 %v753
        %795 = vmatprep.subr.mxu0 0.0
        %796 = vmatpush1.msra.mxu0 %v754
        %797 = vmatprep.subr.mxu0 0.0
        %798 = vmatpush1.msra.mxu0 %v755
        %799 = vmatprep.subr.mxu0 0.0
        %800 = vmatpush1.msra.mxu0 %v756
        %801 = vmatprep.subr.mxu0 0.0
        %802 = vmatpush1.msra.mxu0 %v757
        %803 = vmatprep.subr.mxu0 0.0
        %804 = vmatpush1.msra.mxu0 %v758
        %805 = vmatprep.subr.mxu0 0.0
        %806 = vmatpush1.msra.mxu0 %v759
        %807 = vmatprep.subr.mxu0 0.0
        %808 = vmatpush1.msra.mxu0 %v760
        %809 = vmatprep.subr.mxu0 0.0
        %810 = vmatpush1.msra.mxu0 %v761
        %811 = vmatprep.subr.mxu0 0.0
        %812 = vmatpush1.msra.mxu0 %v762
        %813 = vmatprep.subr.mxu0 0.0
        %814 = vmatpush1.msra.mxu0 %v763
        %815 = vmatprep.subr.mxu0 0.0
        %816 = vmatpush1.msra.mxu0 %v764
        %817 = vmatprep.subr.mxu0 0.0
        %818 = vmatpush1.msra.mxu0 %v765
        %819 = vmatprep.subr.mxu0 0.0
        %820 = vmatpush1.msra.mxu0 %v766
        %821 = vmatprep.subr.mxu0 0.0
        %822 = vmatpush1.msra.mxu0 %v767
        %823 = vmatprep.subr.mxu0 0.0
        %824 = vmatpush1.msra.mxu0 %v768
        %825 = vmatprep.subr.mxu0 0.0
        %826 = vmatpush1.msra.mxu0 %v769
        %827 = vmatprep.subr.mxu0 0.0
        %828 = vmatpush1.msra.mxu0 %v770
        %829 = vmatprep.subr.mxu0 0.0
        %830 = vmatpush1.msra.mxu0 %v771
        %831 = vmatprep.subr.mxu0 0.0
        %832 = vmatpush1.msra.mxu0 %v772
        %833 = vmatprep.subr.mxu0 0.0
        %834 = vmatpush1.msra.mxu0 %v773
        %835 = vmatprep.subr.mxu0 0.0
        %836 = vmatpush1.msra.mxu0 %v774
        %837 = vmatprep.subr.mxu0 0.0
        %838 = vmatpush1.msra.mxu0 %v775
        %839 = vmatprep.subr.mxu0 0.0
        %840 = vmatpush1.msra.mxu0 %v776
        %841 = vmatprep.mubr.f32.mxu0 %v744
        %842 = vmatmul.mubr.f32.gmra.mrb[0].mxu0 %v743
        %v843 = vpop.f32.mrb[0].mxu0
        %v844 = vadd.f32 0.0, %v843
        %v845 = vpop.f32.mrb[0].mxu0
        %846 = vdwg.mxu0
        %vm847 = vcmask 523264
        %848 = vst.msk [vmem:[%s244] sm:$0xff] %vm847, %v844
        %s849 = sand.u32 %s159, 1
        %s850 = scalar_lea.sflag [#allocation3], %s849
        %s851 = sand.u32 %s159, 1
        %s852 = smul.addr %s851, 8
        %s853 = scalar_lea.vmem [#allocation2], %s852
        // Predicated region
        $region45: #{tpu_custom_call.1} parent=43 // pred_check
          %p854 = pneg %p169
        $region46: #{tpu_custom_call.1} parent=43 // pred_check_branch
          %856 = sbr.rel (%p854) target = $region48
        $region47: #{tpu_custom_call.1} parent=43 // pred_region
          %s858 = ssub.s32 128, 128
          %859 = vsyncadd %s850, %s858
          %s860 = smul.addr %s20, 128
          %s861 = scalar_lea.hbm %s6, %s860
          %s863 = sshll.u32 %s853, 4
          %s864 = int_to_ptr.vmem [resolvable:$true] %s863
          %866 = dma.vmem_to_hbm [thread:$0]  %s864, 128, %s861, %s850
        $region48: #{tpu_custom_call.1} parent=43 // pred_fallthru
          _
      $region44: #{tpu_custom_call.1} parent=5 // pred_fallthru
        _
      %p867 = scmp.le.s32.totalorder 2, %s15
      // Predicated region
      $region49: #{tpu_custom_call.1} parent=5 // pred_check
        %p868 = pneg %p867
      $region50: #{tpu_custom_call.1} parent=5 // pred_check_branch
        %870 = sbr.rel (%p868) target = $region52
      $region51: #{tpu_custom_call.1} parent=5 // pred_region
        %s871 = ssub.s32 %s15, 2
        // Predicated region
        $region53: #{tpu_custom_call.1} parent=51 // pred_check
          %p872 = pneg %p175
        $region54: #{tpu_custom_call.1} parent=51 // pred_check_branch
          %874 = sbr.rel (%p872) target = $region56
        $region55: #{tpu_custom_call.1} parent=51 // pred_region
          %s875 = sand.u32 %s160, 1
          %s876 = scalar_lea.sflag [#allocation3], %s875
          %s877 = sand.u32 %s160, 1
          %s878 = smul.addr %s877, 8
          %s879 = scalar_lea.vmem [#allocation2], %s878
          %880 = dma.done %s876, 128
        $region56: #{tpu_custom_call.1} parent=51 // pred_fallthru
          _
      $region52: #{tpu_custom_call.1} parent=5 // pred_fallthru
        _
    $region6: #{tpu_custom_call.1} parent=1 // loop_footer
      %s19 = sadd.s32 1, %s15
    $region7: #{tpu_custom_call.1} parent=1 // loop_footer_branch
      %14 = sbr.rel target = $region3
    $region8: #{tpu_custom_call.1} parent=1 // loop_exit
      _
    %881 = vsyncpa [#allocation3], 1
    %s882 = scalar_lea.sflag [#allocation3], 1
    %883 = vsyncpa %s882, 1

</llo_original>
